<compile_context>
chip_gen: v7x
topology: tpu7x:2x2x1
jax: 0.10.0
libtpu: 0.0.40
codegen_flags: <defaults>
</compile_context>

<pallas_src>
import functools
import math

import jax
import jax.numpy as jnp
from jax.experimental import pallas as pl
from jax.experimental.pallas import tpu as pltpu


# ----------------------------------------------------------------------------- in-kernel math

def _ln(x, gamma, beta, eps=1e-12):
    """LayerNorm over last axis, two-pass variance, f32 math (BERT eps=1e-12)."""
    mean = jnp.mean(x, axis=-1, keepdims=True)
    xc = x - mean
    var = jnp.mean(xc * xc, axis=-1, keepdims=True)
    return xc * jax.lax.rsqrt(var + eps) * gamma + beta


def _gelu(y):
    # tanh-approx GELU (HF BERT uses exact erf; ~1e-3 level difference).
    # TODO(synk): exact erf GELU if bit-parity with the PyTorch reference is required.
    return 0.5 * y * (1.0 + jnp.tanh(0.7978845608028654 * (y + 0.044715 * y * y * y)))


# ----------------------------------------------------------------------------- kernels

def _embed_ln_kernel(x_ref, g_ref, b_ref, o_ref):
    """Embedding LayerNorm on a row tile, no residual, bf16 output."""
    x = x_ref[...].astype(jnp.float32)
    o_ref[...] = _ln(x, g_ref[...], b_ref[...]).astype(o_ref.dtype)


def _encoder_layer_kernel(x_ref, m_ref,
                          wqkv_ref, bqkv_ref, wo_ref, bo_ref,
                          ln1g_ref, ln1b_ref,
                          w1_ref, b1_ref, w2_ref, b2_ref,
                          ln2g_ref, ln2b_ref,
                          o_ref, *, n_heads):
    """One full BERT encoder layer for one batch's (S, H) rows, fully fused."""
    x_bf = x_ref[...]                                  # (S, H) bf16 residual stream
    x = x_bf.astype(jnp.float32)
    S, H = x.shape
    hd = H // n_heads

    # hoisted additive key mask broadcast: one (S, S) broadcast per layer
    mask_b = jnp.broadcast_to(m_ref[0], (S, S))

    # --- fused QKV projection (1/sqrt(hd) already folded into the Q weights) ---
    qkv = jnp.dot(x_bf, wqkv_ref[...], preferred_element_type=jnp.float32) + bqkv_ref[...]
    qkv_bf = qkv.astype(jnp.bfloat16)                  # cast once; slice heads from bf16

    # --- per-head attention, accumulated straight into the output projection ---
    acc = jnp.zeros((S, H), jnp.float32)
    for h in range(n_heads):                           # static unroll; one head live at a time
        q = qkv_bf[:, h * hd:(h + 1) * hd]
        k = qkv_bf[:, H + h * hd:H + (h + 1) * hd]
        v = qkv_bf[:, 2 * H + h * hd:2 * H + (h + 1) * hd]
        s = jax.lax.dot_general(q, k, (((1,), (1,)), ((), ())),
                                preferred_element_type=jnp.float32) + mask_b   # (S, S)
        s = s - jnp.max(s, axis=-1, keepdims=True)
        p = jnp.exp(s)
        p = p * pl.reciprocal(jnp.sum(p, axis=-1, keepdims=True), approx=True)
        ctx = jnp.dot(p.astype(jnp.bfloat16), v, preferred_element_type=jnp.float32)  # (S, hd)
        acc = acc + jnp.dot(ctx.astype(jnp.bfloat16),
                            wo_ref[h * hd:(h + 1) * hd, :],
                            preferred_element_type=jnp.float32)

    attn_out = acc + bo_ref[...]
    x1 = _ln(attn_out + x, ln1g_ref[...], ln1b_ref[...])

    # --- feed-forward + post-LN (residual) ---
    h1 = _gelu(jnp.dot(x1.astype(jnp.bfloat16), w1_ref[...],
                       preferred_element_type=jnp.float32) + b1_ref[...])
    h2 = jnp.dot(h1.astype(jnp.bfloat16), w2_ref[...],
                 preferred_element_type=jnp.float32) + b2_ref[...]
    x2 = _ln(h2 + x1, ln2g_ref[...], ln2b_ref[...])

    o_ref[...] = x2.astype(o_ref.dtype)                # bf16 inter-layer activations


def _head_kernel(cls_ref, pw_ref, pb_ref, ow_ref, ob_ref, o_ref):
    """Pooler tanh(Linear(CLS)) -> dropout(eval: identity) -> classifier (padded lanes)."""
    pooled = jnp.tanh(jnp.dot(cls_ref[...].astype(jnp.bfloat16), pw_ref[...],
                              preferred_element_type=jnp.float32) + pb_ref[...])
    # nn.Dropout(p=0.3) is identity at inference (eval mode).
    # TODO(synk): training-mode stochastic dropout (pltpu.prng_*) not implemented.
    o_ref[...] = (jnp.dot(pooled.astype(jnp.bfloat16), ow_ref[...],
                          preferred_element_type=jnp.float32)
                  + ob_ref[...]).astype(o_ref.dtype)


# ----------------------------------------------------------------------------- wrappers

def _const_spec(shape, single_buffered):
    """Constant-index BlockSpec; single-buffered when supported (no 2x VMEM for weights)."""
    n = len(shape)
    imap = lambda b, _n=n: (0,) * _n
    if single_buffered:
        try:
            return pl.BlockSpec(shape, imap, pipeline_mode=pl.Buffered(1))
        except TypeError:   # pipeline_mode kwarg not available in this JAX build
            pass
    return pl.BlockSpec(shape, imap)


def embed_layernorm(x, gamma, beta):
    M, H = x.shape
    tm = M if M <= 512 else 512
    return pl.pallas_call(
        _embed_ln_kernel,
        out_shape=jax.ShapeDtypeStruct((M, H), jnp.bfloat16),
        grid=(pl.cdiv(M, tm),),
        in_specs=[pl.BlockSpec((tm, H), lambda i: (i, 0)),
                  pl.BlockSpec((1, H), lambda i: (0, 0)),
                  pl.BlockSpec((1, H), lambda i: (0, 0))],
        out_specs=pl.BlockSpec((tm, H), lambda i: (i, 0)),
        compiler_params=pltpu.CompilerParams(dimension_semantics=("parallel",)),
    )(x, gamma, beta)


def _layer_vmem_limit_bytes(S, H, FFN, weight_buffers):
    """Scoped-VMEM request: weights*buffers + activation tiles + attention scratch + headroom."""
    wbytes = weight_buffers * 2 * (H * 3 * H + H * H + H * FFN + FFN * H)       # bf16 weights
    pbytes = 2 * 4 * (3 * H + H + FFN + 5 * H)                                  # f32 biases / LN params
    act = 2 * 2 * 2 * (S * H)                                                   # bf16 x in/out, double-buffered
    scratch = 4 * (3 * S * H + 4 * S * H + S * FFN + 2 * S * S)                 # qkv + intermediates + (S,S) probs
    est = int(1.4 * (wbytes + pbytes + act + scratch)) + (2 << 20)
    return max(16 << 20, min(est, 64 << 20))


def encoder_layer(x, add_mask3, lp, n_heads, single_buffer_weights=True):
    """x: (B*S, H) bf16; add_mask3: (B, 1, S) f32 additive mask; lp: prepared layer params."""
    M, H = x.shape
    B = add_mask3.shape[0]
    S = M // B
    FFN = lp["w1"].shape[1]
    cs = functools.partial(_const_spec, single_buffered=single_buffer_weights)
    vmem_limit = _layer_vmem_limit_bytes(S, H, FFN, 1 if single_buffer_weights else 2)
    return pl.pallas_call(
        functools.partial(_encoder_layer_kernel, n_heads=n_heads),
        out_shape=jax.ShapeDtypeStruct((M, H), jnp.bfloat16),
        grid=(B,),
        in_specs=[
            pl.BlockSpec((S, H), lambda b: (b, 0)),          # this batch's rows
            pl.BlockSpec((1, 1, S), lambda b: (b, 0, 0)),    # this batch's mask
            cs((H, 3 * H)), cs((1, 3 * H)),                  # fused QKV (scale folded into Q)
            cs((H, H)), cs((1, H)),                          # Wo, bo
            cs((1, H)), cs((1, H)),                          # ln1
            cs((H, FFN)), cs((1, FFN)),                      # W1, b1
            cs((FFN, H)), cs((1, H)),                        # W2, b2
            cs((1, H)), cs((1, H)),                          # ln2
        ],
        out_specs=pl.BlockSpec((S, H), lambda b: (b, 0)),
        compiler_params=pltpu.CompilerParams(
            dimension_semantics=("parallel",),               # megacore over batch
            vmem_limit_bytes=vmem_limit),
    )(x, add_mask3,
      lp["wqkv"], lp["bqkv"], lp["wo"], lp["bo"],
      lp["ln1_g"], lp["ln1_b"],
      lp["w1"], lp["b1"], lp["w2"], lp["b2"],
      lp["ln2_g"], lp["ln2_b"])


def classifier_head(cls, pool_w, pool_b, out_w_pad, out_b_pad, n_classes):
    B, H = cls.shape
    NP = out_w_pad.shape[1]          # padded to 128 lanes -> unmasked stores
    logits_pad = pl.pallas_call(
        _head_kernel,
        out_shape=jax.ShapeDtypeStruct((B, NP), jnp.float32),
        grid=(1,),
        in_specs=[pl.BlockSpec((B, H), lambda i: (0, 0)),
                  pl.BlockSpec((H, H), lambda i: (0, 0)),
                  pl.BlockSpec((1, H), lambda i: (0, 0)),
                  pl.BlockSpec((H, NP), lambda i: (0, 0)),
                  pl.BlockSpec((1, NP), lambda i: (0, 0))],
        out_specs=pl.BlockSpec((B, NP), lambda i: (0, 0)),
    )(cls, pool_w, pool_b, out_w_pad, out_b_pad)
    return logits_pad[:, :n_classes]


# ----------------------------------------------------------------------------- model

def sentiment_classifier(params, input_ids, attention_mask, n_heads):
    B, S = input_ids.shape
    H = params["word_emb"].shape[1]

    # --- embeddings (gathers are glue; LN is a tiled kernel, bf16 output) ---
    x = (params["word_emb"][input_ids]
         + params["pos_emb"][jnp.arange(S)][None, :, :]
         + params["type_emb"][0][None, None, :])
    x = x.reshape(B * S, H).astype(jnp.float32)
    x = embed_layernorm(x, params["emb_ln_g"], params["emb_ln_b"])     # (B*S, H) bf16

    # additive attention mask, BERT-style: (1 - mask) * -10000, shaped (B, 1, S)
    add_mask3 = ((1.0 - attention_mask.astype(jnp.float32)) * -10000.0).reshape(B, 1, S)

    # --- fused encoder layers: one pallas_call per layer ---
    use_sb = True
    for li, lp in enumerate(params["layers"]):
        if li == 0:
            try:
                x = encoder_layer(x, add_mask3, lp, n_heads, single_buffer_weights=True)
                continue
            except Exception:       # fall back to default double-buffered weight specs
                use_sb = False
        x = encoder_layer(x, add_mask3, lp, n_heads, single_buffer_weights=use_sb)

    # --- pooler(CLS) + dropout(identity) + classifier, one fused kernel ---
    cls = x.reshape(B, S, H)[:, 0, :]
    return classifier_head(cls, params["pool_w"], params["pool_b"],
                           params["out_w_pad"], params["out_b_pad"],
                           params["n_classes"])


# ----------------------------------------------------------------------------- params

def init_params(key, vocab, max_pos, hidden, ffn, n_layers, n_heads, n_classes, lane_pad=128):
    """Deterministic random weights, pre-fused/padded/bf16-cast for the kernels."""
    def norm(k, shape):
        return (0.02 * jax.random.normal(k, shape)).astype(jnp.float32)

    keys = jax.random.split(key, 5 + n_layers)
    out_w = norm(keys[4], (hidden, n_classes))
    out_b = jnp.zeros((n_classes,), jnp.float32)
    # pad classifier to 128 output lanes (sliced back in the wrapper)
    out_w_pad = jnp.zeros((hidden, lane_pad), jnp.float32).at[:, :n_classes].set(out_w)
    out_b_pad = jnp.zeros((1, lane_pad), jnp.float32).at[0, :n_classes].set(out_b)

    params = {
        "word_emb": norm(keys[0], (vocab, hidden)),
        "pos_emb":  norm(keys[1], (max_pos, hidden)),
        "type_emb": norm(keys[2], (2, hidden)),
        "emb_ln_g": jnp.ones((1, hidden), jnp.float32),
        "emb_ln_b": jnp.zeros((1, hidden), jnp.float32),
        "pool_w":   norm(keys[3], (hidden, hidden)).astype(jnp.bfloat16),
        "pool_b":   jnp.zeros((1, hidden), jnp.float32),
        "out_w_pad": out_w_pad.astype(jnp.bfloat16),
        "out_b_pad": out_b_pad,
        "n_classes": n_classes,
        "layers":   [],
    }
    scale = 1.0 / math.sqrt(hidden // n_heads)         # attention scale folded into Wq
    for li in range(n_layers):
        lk = jax.random.split(keys[5 + li], 6)
        wq, wk, wv = (norm(lk[0], (hidden, hidden)), norm(lk[1], (hidden, hidden)),
                      norm(lk[2], (hidden, hidden)))
        params["layers"].append({
            # fused QKV: one (H, 3H) matmul, bf16 weights / f32 bias; scale pre-folded into Q
            "wqkv": jnp.concatenate([wq * scale, wk, wv], axis=1).astype(jnp.bfloat16),
            "bqkv": jnp.zeros((1, 3 * hidden), jnp.float32),
            "wo": norm(lk[3], (hidden, hidden)).astype(jnp.bfloat16),
            "bo": jnp.zeros((1, hidden), jnp.float32),
            "ln1_g": jnp.ones((1, hidden), jnp.float32),
            "ln1_b": jnp.zeros((1, hidden), jnp.float32),
            "w1": norm(lk[4], (hidden, ffn)).astype(jnp.bfloat16),
            "b1": jnp.zeros((1, ffn), jnp.float32),
            "w2": norm(lk[5], (ffn, hidden)).astype(jnp.bfloat16),
            "b2": jnp.zeros((1, hidden), jnp.float32),
            "ln2_g": jnp.ones((1, hidden), jnp.float32),
            "ln2_b": jnp.zeros((1, hidden), jnp.float32),
        })
    return params


# ----------------------------------------------------------------------------- main

if __name__ == "__main__":
    B, S = 2, 8
    VOCAB, MAX_POS, HIDDEN, HEADS, FFN, LAYERS, N_CLASSES = 64, 16, 32, 4, 64, 2, 3

    key = jax.random.PRNGKey(0)
    pkey, ikey = jax.random.split(key)
    params = init_params(pkey, VOCAB, MAX_POS, HIDDEN, FFN, LAYERS, HEADS, N_CLASSES)

    input_ids = jax.random.randint(ikey, (B, S), 0, VOCAB, dtype=jnp.int32)
    attention_mask = jnp.ones((B, S), jnp.int32).at[1, -2:].set(0)  # second row padded

    logits = sentiment_classifier(params, input_ids, attention_mask, HEADS)
    jax.block_until_ready(logits)
    assert logits.shape == (B, N_CLASSES) and logits.dtype == jnp.float32
    assert bool(jnp.all(jnp.isfinite(logits)))
    print("KERNEL_OK")
</pallas_src>

<mosaic_0001>
module attributes {stable_mosaic.version = 11 : i64} {
  func.func @_embed_ln_kernel(%arg0: i32, %arg1: memref<16x32xf32, #tpu.memory_space<vmem>>, %arg2: memref<1x32xf32, #tpu.memory_space<vmem>>, %arg3: memref<1x32xf32, #tpu.memory_space<vmem>>, %arg4: memref<16x32xbf16, #tpu.memory_space<vmem>>) attributes {dimension_semantics = [#tpu.dimension_semantics<parallel>], iteration_bounds = array<i64: 1>, scalar_prefetch = 0 : i64, scratch_operands = 0 : i64, tpu.core_type = #tpu.core_type<tc>, window_params = [{transform_indices = @transform_0, window_bounds = array<i64: 16, 32>}, {pipeline_mode = #tpu.pipeline_mode<synchronous>, transform_indices = @transform_1, window_bounds = array<i64: 1, 32>}, {pipeline_mode = #tpu.pipeline_mode<synchronous>, transform_indices = @transform_2, window_bounds = array<i64: 1, 32>}, {transform_indices = @transform_3, window_bounds = array<i64: 16, 32>}]} {
    %c0 = arith.constant 0 : index
    %c0_0 = arith.constant 0 : index
    %0 = vector.load %arg1[%c0, %c0_0] : memref<16x32xf32, #tpu.memory_space<vmem>>, vector<16x32xf32>
    %c0_1 = arith.constant 0 : index
    %c0_2 = arith.constant 0 : index
    %1 = vector.load %arg2[%c0_1, %c0_2] : memref<1x32xf32, #tpu.memory_space<vmem>>, vector<1x32xf32>
    %c0_3 = arith.constant 0 : index
    %c0_4 = arith.constant 0 : index
    %2 = vector.load %arg3[%c0_3, %c0_4] : memref<1x32xf32, #tpu.memory_space<vmem>>, vector<1x32xf32>
    %cst = arith.constant dense<0.000000e+00> : vector<16xf32>
    %3 = vector.multi_reduction <add>, %0, %cst [1] : vector<16x32xf32> to vector<16xf32>
    %4 = vector.shape_cast %3 : vector<16xf32> to vector<16x1xf32>
    %cst_5 = arith.constant 3.200000e+01 : f32
    %5 = vector.broadcast %cst_5 : f32 to vector<16x1xf32>
    %6 = arith.divf %4, %5 : vector<16x1xf32>
    %7 = vector.broadcast %6 : vector<16x1xf32> to vector<16x32xf32>
    %8 = arith.subf %0, %7 : vector<16x32xf32>
    %9 = arith.mulf %8, %8 : vector<16x32xf32>
    %cst_6 = arith.constant dense<0.000000e+00> : vector<16xf32>
    %10 = vector.multi_reduction <add>, %9, %cst_6 [1] : vector<16x32xf32> to vector<16xf32>
    %11 = vector.shape_cast %10 : vector<16xf32> to vector<16x1xf32>
    %cst_7 = arith.constant 3.200000e+01 : f32
    %12 = vector.broadcast %cst_7 : f32 to vector<16x1xf32>
    %13 = arith.divf %11, %12 : vector<16x1xf32>
    %cst_8 = arith.constant 9.99999996E-13 : f32
    %14 = vector.broadcast %cst_8 : f32 to vector<16x1xf32>
    %15 = arith.addf %13, %14 : vector<16x1xf32>
    %16 = math.rsqrt %15 : vector<16x1xf32>
    %17 = vector.broadcast %16 : vector<16x1xf32> to vector<16x32xf32>
    %18 = arith.mulf %8, %17 : vector<16x32xf32>
    %19 = vector.broadcast %1 : vector<1x32xf32> to vector<16x32xf32>
    %20 = arith.mulf %18, %19 : vector<16x32xf32>
    %21 = vector.broadcast %2 : vector<1x32xf32> to vector<16x32xf32>
    %22 = arith.addf %20, %21 : vector<16x32xf32>
    %23 = arith.truncf %22 : vector<16x32xf32> to vector<16x32xbf16>
    %c0_9 = arith.constant 0 : index
    %c0_10 = arith.constant 0 : index
    %24 = vector.load %arg4[%c0_9, %c0_10] : memref<16x32xbf16, #tpu.memory_space<vmem>>, vector<16x32xbf16>
    tpu.vector_store %arg4[%c0_9, %c0_10], %23 {strides = array<i32>} : memref<16x32xbf16, #tpu.memory_space<vmem>>, vector<16x32xbf16>,
    return
  }
  func.func @transform_0(%arg0: i32) -> (i32, i32) {
    %c0_i32 = arith.constant 0 : i32
    %c0_i32_0 = arith.constant 0 : i32
    return %arg0, %c0_i32 : i32, i32
  }
  func.func @transform_1(%arg0: i32) -> (i32, i32) {
    %c0_i32 = arith.constant 0 : i32
    %c0_i32_0 = arith.constant 0 : i32
    %c0_i32_1 = arith.constant 0 : i32
    return %c0_i32, %c0_i32_0 : i32, i32
  }
  func.func @transform_2(%arg0: i32) -> (i32, i32) {
    %c0_i32 = arith.constant 0 : i32
    %c0_i32_0 = arith.constant 0 : i32
    %c0_i32_1 = arith.constant 0 : i32
    return %c0_i32, %c0_i32_0 : i32, i32
  }
  func.func @transform_3(%arg0: i32) -> (i32, i32) {
    %c0_i32 = arith.constant 0 : i32
    %c0_i32_0 = arith.constant 0 : i32
    return %arg0, %c0_i32 : i32, i32
  }
}

</mosaic_0001>

<llo_original>
// kernel: tpu_custom_call.1
$region0: #{tpu_custom_call.1}
  #allocation0 [shape = 'u32[]', space=smem, size = 0x4, offset = 0x4, fixed_abs, tag = 'smem constant byte address 0x4 - core index']
  #allocation1 [shape = 'u32[144,128]{1,0:T(1,128)}', space=vmem, size = 0x12000, scoped, tag = 'internal scratch']
  %s0 = inlined_call_operand.hbm [shape: f32[16,32], index: 0, kind: input, shape index: {}]
  %s1 = inlined_call_operand.vmem [shape: f32[1,32], index: 1, kind: input, shape index: {}]
  %s2 = inlined_call_operand.vmem [shape: f32[1,32], index: 2, kind: input, shape index: {}]
  %s3 = inlined_call_operand.hbm [shape: bf16[16,32], index: 3, kind: output, shape index: {}]
  %s4 = sld [smem:[#allocation0]]
  $region26: #{tpu_custom_call.1} parent=0
    _
  %s6 = ssub.s32 1, %s4
  %s7 = scalar_select 0, %s6, %s4
  $region1: #{tpu_custom_call.1} parent=0
    #allocation2 [shape = 'u8[8192]{0}', space=vmem, size = 0x2000, scoped, tag = 'input window, operand 0, single buffered']
    #allocation3 [shape = 's32[1]{0}', space=sflag, size = 0x4, scoped, tag = 'scoped memory for tpu_custom_call.1']
    #allocation4 [shape = 's32[1]{0}', space=sflag, size = 0x4, scoped, tag = 'scoped memory for tpu_custom_call.1']
    #allocation5 [shape = 'u8[4096]{0}', space=vmem, size = 0x1000, scoped, tag = 'output window, operand 0, single buffered']
    %8 = vsyncpa [#allocation3], 0
    %9 = vsyncpa [#allocation4], 0
    // Predicated region
    $region2: #{tpu_custom_call.1} parent=1 // pred_check
      _
    $region3: #{tpu_custom_call.1} parent=1 // pred_check_branch
      %11 = sbr.rel (0) target = $region5
    $region4: #{tpu_custom_call.1} parent=1 // pred_region
      %s13 = ssub.s32 256, 256
      %14 = vsyncadd [#allocation3], %s13
      %s15 = sshll.u32 [#allocation2], 4
      %s16 = int_to_ptr.vmem [resolvable:$true] %s15
      %21 = dma.hbm_to_vmem [thread:$0]  %s0, 256, %s16, [#allocation3], 128, 128, 8
    $region5: #{tpu_custom_call.1} parent=1 // pred_fallthru
      _
    // Predicated region
    $region6: #{tpu_custom_call.1} parent=1 // pred_check
      _
    $region7: #{tpu_custom_call.1} parent=1 // pred_check_branch
      %23 = sbr.rel (0) target = $region9
    $region8: #{tpu_custom_call.1} parent=1 // pred_region
      _
    $region9: #{tpu_custom_call.1} parent=1 // pred_fallthru
      _
    // Predicated region
    $region10: #{tpu_custom_call.1} parent=1 // pred_check
      _
    $region11: #{tpu_custom_call.1} parent=1 // pred_check_branch
      %25 = sbr.rel (0) target = $region13
    $region12: #{tpu_custom_call.1} parent=1 // pred_region
      _
    $region13: #{tpu_custom_call.1} parent=1 // pred_fallthru
      _
    // Predicated region
    $region14: #{tpu_custom_call.1} parent=1 // pred_check
      _
    $region15: #{tpu_custom_call.1} parent=1 // pred_check_branch
      %27 = sbr.rel (0) target = $region17
    $region16: #{tpu_custom_call.1} parent=1 // pred_region
      %28 = dma.done [#allocation3], 256
    $region17: #{tpu_custom_call.1} parent=1 // pred_fallthru
      _
    %v29 = vld [vmem:[#allocation2] sm:$0xff]
    %v30 = vld [vmem:[#allocation2 + $0x8] sm:$0xff]
    %v31 = vld [vmem:[%s1] sm:$0x1]
    %v32 = vld [vmem:[%s2] sm:$0x1]
    %vm33 = vcmask 261120
    %v34 = vsel %vm33, %v29, 0.0
    %35 = vadd.xlane.f32.xlu0 %v34
    %v36 = vpop.xlane.xlu0 %35
    %v37 = vsel %vm33, %v30, 0.0
    %38 = vadd.xlane.f32.xlu0 %v37
    %v39 = vpop.xlane.xlu0 %38
    %v40 = vrcp.pop 32.0
    %v41 = vmul.f32 %v36, %v40
    %v42 = vmul.f32 %v39, %v40
    %v43 = vsub.f32 %v29, %v41
    %v44 = vsub.f32 %v30, %v42
    %v45 = vmul.f32 %v43, %v43
    %v46 = vmul.f32 %v44, %v44
    %v47 = vsel %vm33, %v45, 0.0
    %48 = vadd.xlane.f32.xlu0 %v47
    %v49 = vpop.xlane.xlu0 %48
    %v50 = vsel %vm33, %v46, 0.0
    %51 = vadd.xlane.f32.xlu0 %v50
    %v52 = vpop.xlane.xlu0 %51
    %v53 = vmul.f32 %v49, %v40
    %v54 = vmul.f32 %v52, %v40
    %v55 = vadd.f32 %v53, 1e-12
    %v56 = vadd.f32 %v54, 1e-12
    %v57 = vrsqrt.pop %v55
    %v58 = vrsqrt.pop %v56
    %v59 = vmul.f32 %v43, %v57
    %v60 = vmul.f32 %v44, %v58
    %v62 = vlaneseq
    %v63 = vshrl.u32 %v62, 7
    %v64 = vsub.s32 0, %v63
    %v65 = vrot.slane %v31, %v64
    %v67 = vmul.f32 %v59, %v65
    %v68 = vmul.f32 %v60, %v65
    %v70 = vlaneseq
    %v71 = vshrl.u32 %v70, 7
    %v72 = vsub.s32 0, %v71
    %v73 = vrot.slane %v32, %v72
    %v75 = vadd.f32 %v67, %v73
    %v76 = vadd.f32 %v68, %v73
    %v77 = vpack.c.bf16 %v76, %v75
    %v79 = vunpack.c.l.b16 %v77
    %v80 = vunpack.c.h.b16 %v77
    %v81 = vpack.c.b16 %v79, %v79
    %v82 = vpack.c.b16 %v80, %v80
    %vm85 = vcmask 257024
    %86 = vst.msk [vmem:[#allocation5] sm:$0xf] %vm85, %v81
    %87 = vst.msk [vmem:[#allocation5 + $0x4] sm:$0xf] %vm85, %v82
    // Predicated region
    $region18: #{tpu_custom_call.1} parent=1 // pred_check
      _
    $region19: #{tpu_custom_call.1} parent=1 // pred_check_branch
      %89 = sbr.rel (0) target = $region21
    $region20: #{tpu_custom_call.1} parent=1 // pred_region
      %s91 = ssub.s32 128, 128
      %92 = vsyncadd [#allocation4], %s91
      %s93 = sshll.u32 [#allocation5], 4
      %s94 = int_to_ptr.vmem [resolvable:$true] %s93
      %99 = dma.vmem_to_hbm [thread:$0]  %s94, 128, %s3, [#allocation4], 64, 64, 4
    $region21: #{tpu_custom_call.1} parent=1 // pred_fallthru
      _
    // Predicated region
    $region22: #{tpu_custom_call.1} parent=1 // pred_check
      _
    $region23: #{tpu_custom_call.1} parent=1 // pred_check_branch
      %101 = sbr.rel (0) target = $region25
    $region24: #{tpu_custom_call.1} parent=1 // pred_region
      %102 = dma.done [#allocation4], 128
    $region25: #{tpu_custom_call.1} parent=1 // pred_fallthru
      _
    %103 = vsyncpa [#allocation3], 1
    %104 = vsyncpa [#allocation4], 1

</llo_original>
